<compile_context>
chip_gen: v7x
topology: tpu7x:2x2x1
jax: 0.10.0
libtpu: 0.0.40
codegen_flags: <defaults>
</compile_context>

<pallas_src>
import jax
import jax.numpy as jnp
from jax.experimental import pallas as pl
from jax.experimental.pallas import tpu as pltpu


def linear_kernel(w_sref, b_sref, x_ref, o_ref):
    """y_T = W @ x_T + b, done as VPU broadcast-FMAs (no MXU).

    w_sref: SMEM (OUT, IN) f32   — PyTorch layout, read as scalars
    b_sref: SMEM (OUT,)    f32
    x_ref : VMEM (IN, TILE_B)    — batch on the 128-lane axis
    o_ref : VMEM (OUT, TILE_B)
    """
    out_dim, in_dim = w_sref.shape
    x = x_ref[...].astype(jnp.float32)          # (IN, TILE_B), lane-dense
    rows = []
    for o in range(out_dim):                    # static, tiny (4)
        acc = x[0:1, :] * w_sref[o, 0]          # scalar (SMEM) * vector (VPU)
        for k in range(1, in_dim):
            acc = acc + x[k:k + 1, :] * w_sref[o, k]
        rows.append(acc + b_sref[o])
    # Single lane-dense store of the whole (OUT, TILE_B) block.
    o_ref[...] = jnp.concatenate(rows, axis=0).astype(o_ref.dtype)


def simple_model_forward(x, weight, bias, *, tile_b=1024):
    """y = x @ weight.T + bias (PyTorch nn.Linear semantics).

    `weight` is PyTorch-layout (OUT, IN). The kernel computes the transposed
    problem so the batch axis is lane-dense; the wrapper transposes x/y once
    (layout plumbing only).
    """
    B, IN = x.shape
    OUT = weight.shape[0]

    x_t = x.T                                   # (IN, B): batch -> lanes

    # Small batch: one block covering everything (no grid steps, no padding).
    tile = B if B <= tile_b else tile_b
    n_tiles = pl.cdiv(B, tile)
    B_pad = n_tiles * tile
    if B_pad != B:
        # TODO(synk): for huge ragged batches, handle the last tile in-kernel
        # (pl.when + masked pltpu.store) instead of padding through HBM.
        x_t = jnp.pad(x_t, ((0, 0), (0, B_pad - B)))

    itemsize = jnp.dtype(x.dtype).itemsize
    cost = pl.CostEstimate(
        flops=2 * B_pad * IN * OUT,             # FMAs on the VPU, still 2*MNK
        transcendentals=0,
        bytes_accessed=itemsize * (B_pad * IN + B_pad * OUT)
        + 4 * (IN * OUT + OUT),
    )

    out_t = pl.pallas_call(
        linear_kernel,
        out_shape=jax.ShapeDtypeStruct((OUT, B_pad), x.dtype),
        grid_spec=pltpu.PrefetchScalarGridSpec(
            num_scalar_prefetch=0,
            grid=(n_tiles,),
            in_specs=[
                # Tiny parameters live in SMEM and are read as scalars.
                pl.BlockSpec(memory_space=pltpu.MemorySpace.SMEM),  # W (OUT, IN)
                pl.BlockSpec(memory_space=pltpu.MemorySpace.SMEM),  # b (OUT,)
                # Activations tiled along the lane (batch) axis only.
                pl.BlockSpec((IN, tile), lambda i: (0, i)),
            ],
            out_specs=pl.BlockSpec((OUT, tile), lambda i: (0, i)),
        ),
        compiler_params=pltpu.CompilerParams(
            # Only pay for a cross-TC split (v7x) when there is enough work.
            dimension_semantics=(
                ("parallel",) if n_tiles >= 4 else ("arbitrary",)
            ),
        ),
        cost_estimate=cost,
    )(weight.astype(jnp.float32), bias.astype(jnp.float32), x_t)

    y_t = out_t[:, :B] if B_pad != B else out_t
    return y_t.T                                # back to (B, OUT)


if __name__ == "__main__":
    key = jax.random.PRNGKey(0)
    kx, kw, kb = jax.random.split(key, 3)

    B, IN, OUT = 16, 4, 4

    # Deterministic parameter init (mimics PyTorch's U(-1/sqrt(in), 1/sqrt(in)))
    bound = 1.0 / jnp.sqrt(jnp.float32(IN))
    weight = jax.random.uniform(kw, (OUT, IN), jnp.float32, -bound, bound)
    bias = jax.random.uniform(kb, (OUT,), jnp.float32, -bound, bound)

    x = jax.random.normal(kx, (B, IN), jnp.float32)

    y = simple_model_forward(x, weight, bias)
    jax.block_until_ready(y)

    # Reference check against plain JAX
    y_ref = x @ weight.T + bias
    assert y.shape == (B, OUT)
    assert jnp.allclose(y, y_ref, atol=1e-5, rtol=1e-5)

    print("KERNEL_OK")
</pallas_src>

<mosaic_0001>
module attributes {stable_mosaic.version = 11 : i64} {
  func.func @linear_kernel(%arg0: i32, %arg1: memref<4x4xf32, #tpu.memory_space<smem>>, %arg2: memref<4xf32, #tpu.memory_space<smem>>, %arg3: memref<4x16xf32, #tpu.memory_space<vmem>>, %arg4: memref<4x16xf32, #tpu.memory_space<vmem>>) attributes {dimension_semantics = [#tpu.dimension_semantics<arbitrary>], iteration_bounds = array<i64: 1>, scalar_prefetch = 0 : i64, scratch_operands = 0 : i64, tpu.core_type = #tpu.core_type<tc>, window_params = [{transform_indices = @transform_0, window_bounds = array<i64: 4, 4>}, {transform_indices = @transform_1, window_bounds = array<i64: 4>}, {transform_indices = @transform_2, window_bounds = array<i64: 4, 16>}, {transform_indices = @transform_3, window_bounds = array<i64: 4, 16>}]} {
    %c0 = arith.constant 0 : index
    %c0_0 = arith.constant 0 : index
    %0 = vector.load %arg3[%c0, %c0_0] : memref<4x16xf32, #tpu.memory_space<vmem>>, vector<4x16xf32>
    %1 = vector.extract_strided_slice %0 {offsets = [0, 0], sizes = [1, 16], strides = [1, 1]} : vector<4x16xf32> to vector<1x16xf32>
    %c0_1 = arith.constant 0 : index
    %c0_2 = arith.constant 0 : index
    %2 = memref.load %arg1[%c0_1, %c0_2] : memref<4x4xf32, #tpu.memory_space<smem>>
    %3 = vector.broadcast %2 : f32 to vector<1x16xf32>
    %4 = arith.mulf %1, %3 : vector<1x16xf32>
    %5 = vector.extract_strided_slice %0 {offsets = [1, 0], sizes = [1, 16], strides = [1, 1]} : vector<4x16xf32> to vector<1x16xf32>
    %c0_3 = arith.constant 0 : index
    %c1 = arith.constant 1 : index
    %6 = memref.load %arg1[%c0_3, %c1] : memref<4x4xf32, #tpu.memory_space<smem>>
    %7 = vector.broadcast %6 : f32 to vector<1x16xf32>
    %8 = arith.mulf %5, %7 : vector<1x16xf32>
    %9 = arith.addf %4, %8 : vector<1x16xf32>
    %10 = vector.extract_strided_slice %0 {offsets = [2, 0], sizes = [1, 16], strides = [1, 1]} : vector<4x16xf32> to vector<1x16xf32>
    %c0_4 = arith.constant 0 : index
    %c2 = arith.constant 2 : index
    %11 = memref.load %arg1[%c0_4, %c2] : memref<4x4xf32, #tpu.memory_space<smem>>
    %12 = vector.broadcast %11 : f32 to vector<1x16xf32>
    %13 = arith.mulf %10, %12 : vector<1x16xf32>
    %14 = arith.addf %9, %13 : vector<1x16xf32>
    %15 = vector.extract_strided_slice %0 {offsets = [3, 0], sizes = [1, 16], strides = [1, 1]} : vector<4x16xf32> to vector<1x16xf32>
    %c0_5 = arith.constant 0 : index
    %c3 = arith.constant 3 : index
    %16 = memref.load %arg1[%c0_5, %c3] : memref<4x4xf32, #tpu.memory_space<smem>>
    %17 = vector.broadcast %16 : f32 to vector<1x16xf32>
    %18 = arith.mulf %15, %17 : vector<1x16xf32>
    %19 = arith.addf %14, %18 : vector<1x16xf32>
    %c0_6 = arith.constant 0 : index
    %20 = memref.load %arg2[%c0_6] : memref<4xf32, #tpu.memory_space<smem>>
    %21 = vector.broadcast %20 : f32 to vector<1x16xf32>
    %22 = arith.addf %19, %21 : vector<1x16xf32>
    %23 = vector.extract_strided_slice %0 {offsets = [0, 0], sizes = [1, 16], strides = [1, 1]} : vector<4x16xf32> to vector<1x16xf32>
    %c1_7 = arith.constant 1 : index
    %c0_8 = arith.constant 0 : index
    %24 = memref.load %arg1[%c1_7, %c0_8] : memref<4x4xf32, #tpu.memory_space<smem>>
    %25 = vector.broadcast %24 : f32 to vector<1x16xf32>
    %26 = arith.mulf %23, %25 : vector<1x16xf32>
    %27 = vector.extract_strided_slice %0 {offsets = [1, 0], sizes = [1, 16], strides = [1, 1]} : vector<4x16xf32> to vector<1x16xf32>
    %c1_9 = arith.constant 1 : index
    %c1_10 = arith.constant 1 : index
    %28 = memref.load %arg1[%c1_9, %c1_10] : memref<4x4xf32, #tpu.memory_space<smem>>
    %29 = vector.broadcast %28 : f32 to vector<1x16xf32>
    %30 = arith.mulf %27, %29 : vector<1x16xf32>
    %31 = arith.addf %26, %30 : vector<1x16xf32>
    %32 = vector.extract_strided_slice %0 {offsets = [2, 0], sizes = [1, 16], strides = [1, 1]} : vector<4x16xf32> to vector<1x16xf32>
    %c1_11 = arith.constant 1 : index
    %c2_12 = arith.constant 2 : index
    %33 = memref.load %arg1[%c1_11, %c2_12] : memref<4x4xf32, #tpu.memory_space<smem>>
    %34 = vector.broadcast %33 : f32 to vector<1x16xf32>
    %35 = arith.mulf %32, %34 : vector<1x16xf32>
    %36 = arith.addf %31, %35 : vector<1x16xf32>
    %37 = vector.extract_strided_slice %0 {offsets = [3, 0], sizes = [1, 16], strides = [1, 1]} : vector<4x16xf32> to vector<1x16xf32>
    %c1_13 = arith.constant 1 : index
    %c3_14 = arith.constant 3 : index
    %38 = memref.load %arg1[%c1_13, %c3_14] : memref<4x4xf32, #tpu.memory_space<smem>>
    %39 = vector.broadcast %38 : f32 to vector<1x16xf32>
    %40 = arith.mulf %37, %39 : vector<1x16xf32>
    %41 = arith.addf %36, %40 : vector<1x16xf32>
    %c1_15 = arith.constant 1 : index
    %42 = memref.load %arg2[%c1_15] : memref<4xf32, #tpu.memory_space<smem>>
    %43 = vector.broadcast %42 : f32 to vector<1x16xf32>
    %44 = arith.addf %41, %43 : vector<1x16xf32>
    %45 = vector.extract_strided_slice %0 {offsets = [0, 0], sizes = [1, 16], strides = [1, 1]} : vector<4x16xf32> to vector<1x16xf32>
    %c2_16 = arith.constant 2 : index
    %c0_17 = arith.constant 0 : index
    %46 = memref.load %arg1[%c2_16, %c0_17] : memref<4x4xf32, #tpu.memory_space<smem>>
    %47 = vector.broadcast %46 : f32 to vector<1x16xf32>
    %48 = arith.mulf %45, %47 : vector<1x16xf32>
    %49 = vector.extract_strided_slice %0 {offsets = [1, 0], sizes = [1, 16], strides = [1, 1]} : vector<4x16xf32> to vector<1x16xf32>
    %c2_18 = arith.constant 2 : index
    %c1_19 = arith.constant 1 : index
    %50 = memref.load %arg1[%c2_18, %c1_19] : memref<4x4xf32, #tpu.memory_space<smem>>
    %51 = vector.broadcast %50 : f32 to vector<1x16xf32>
    %52 = arith.mulf %49, %51 : vector<1x16xf32>
    %53 = arith.addf %48, %52 : vector<1x16xf32>
    %54 = vector.extract_strided_slice %0 {offsets = [2, 0], sizes = [1, 16], strides = [1, 1]} : vector<4x16xf32> to vector<1x16xf32>
    %c2_20 = arith.constant 2 : index
    %c2_21 = arith.constant 2 : index
    %55 = memref.load %arg1[%c2_20, %c2_21] : memref<4x4xf32, #tpu.memory_space<smem>>
    %56 = vector.broadcast %55 : f32 to vector<1x16xf32>
    %57 = arith.mulf %54, %56 : vector<1x16xf32>
    %58 = arith.addf %53, %57 : vector<1x16xf32>
    %59 = vector.extract_strided_slice %0 {offsets = [3, 0], sizes = [1, 16], strides = [1, 1]} : vector<4x16xf32> to vector<1x16xf32>
    %c2_22 = arith.constant 2 : index
    %c3_23 = arith.constant 3 : index
    %60 = memref.load %arg1[%c2_22, %c3_23] : memref<4x4xf32, #tpu.memory_space<smem>>
    %61 = vector.broadcast %60 : f32 to vector<1x16xf32>
    %62 = arith.mulf %59, %61 : vector<1x16xf32>
    %63 = arith.addf %58, %62 : vector<1x16xf32>
    %c2_24 = arith.constant 2 : index
    %64 = memref.load %arg2[%c2_24] : memref<4xf32, #tpu.memory_space<smem>>
    %65 = vector.broadcast %64 : f32 to vector<1x16xf32>
    %66 = arith.addf %63, %65 : vector<1x16xf32>
    %67 = vector.extract_strided_slice %0 {offsets = [0, 0], sizes = [1, 16], strides = [1, 1]} : vector<4x16xf32> to vector<1x16xf32>
    %c3_25 = arith.constant 3 : index
    %c0_26 = arith.constant 0 : index
    %68 = memref.load %arg1[%c3_25, %c0_26] : memref<4x4xf32, #tpu.memory_space<smem>>
    %69 = vector.broadcast %68 : f32 to vector<1x16xf32>
    %70 = arith.mulf %67, %69 : vector<1x16xf32>
    %71 = vector.extract_strided_slice %0 {offsets = [1, 0], sizes = [1, 16], strides = [1, 1]} : vector<4x16xf32> to vector<1x16xf32>
    %c3_27 = arith.constant 3 : index
    %c1_28 = arith.constant 1 : index
    %72 = memref.load %arg1[%c3_27, %c1_28] : memref<4x4xf32, #tpu.memory_space<smem>>
    %73 = vector.broadcast %72 : f32 to vector<1x16xf32>
    %74 = arith.mulf %71, %73 : vector<1x16xf32>
    %75 = arith.addf %70, %74 : vector<1x16xf32>
    %76 = vector.extract_strided_slice %0 {offsets = [2, 0], sizes = [1, 16], strides = [1, 1]} : vector<4x16xf32> to vector<1x16xf32>
    %c3_29 = arith.constant 3 : index
    %c2_30 = arith.constant 2 : index
    %77 = memref.load %arg1[%c3_29, %c2_30] : memref<4x4xf32, #tpu.memory_space<smem>>
    %78 = vector.broadcast %77 : f32 to vector<1x16xf32>
    %79 = arith.mulf %76, %78 : vector<1x16xf32>
    %80 = arith.addf %75, %79 : vector<1x16xf32>
    %81 = vector.extract_strided_slice %0 {offsets = [3, 0], sizes = [1, 16], strides = [1, 1]} : vector<4x16xf32> to vector<1x16xf32>
    %c3_31 = arith.constant 3 : index
    %c3_32 = arith.constant 3 : index
    %82 = memref.load %arg1[%c3_31, %c3_32] : memref<4x4xf32, #tpu.memory_space<smem>>
    %83 = vector.broadcast %82 : f32 to vector<1x16xf32>
    %84 = arith.mulf %81, %83 : vector<1x16xf32>
    %85 = arith.addf %80, %84 : vector<1x16xf32>
    %c3_33 = arith.constant 3 : index
    %86 = memref.load %arg2[%c3_33] : memref<4xf32, #tpu.memory_space<smem>>
    %87 = vector.broadcast %86 : f32 to vector<1x16xf32>
    %88 = arith.addf %85, %87 : vector<1x16xf32>
    %89 = tpu.concatenate %22, %44, %66, %88 in 0 : vector<1x16xf32>, vector<1x16xf32>, vector<1x16xf32>, vector<1x16xf32> -> vector<4x16xf32>
    %c0_34 = arith.constant 0 : index
    %c0_35 = arith.constant 0 : index
    %90 = vector.load %arg4[%c0_34, %c0_35] : memref<4x16xf32, #tpu.memory_space<vmem>>, vector<4x16xf32>
    tpu.vector_store %arg4[%c0_34, %c0_35], %89 {strides = array<i32>} : memref<4x16xf32, #tpu.memory_space<vmem>>, vector<4x16xf32>,
    return
  }
  func.func @transform_0(%arg0: i32) -> (i32, i32) {
    %c0_i32 = arith.constant 0 : i32
    %c0_i32_0 = arith.constant 0 : i32
    %c0_i32_1 = arith.constant 0 : i32
    return %c0_i32, %c0_i32_0 : i32, i32
  }
  func.func @transform_1(%arg0: i32) -> i32 {
    %c0_i32 = arith.constant 0 : i32
    %c0_i32_0 = arith.constant 0 : i32
    return %c0_i32 : i32
  }
  func.func @transform_2(%arg0: i32) -> (i32, i32) {
    %c0_i32 = arith.constant 0 : i32
    %c0_i32_0 = arith.constant 0 : i32
    return %c0_i32, %arg0 : i32, i32
  }
  func.func @transform_3(%arg0: i32) -> (i32, i32) {
    %c0_i32 = arith.constant 0 : i32
    %c0_i32_0 = arith.constant 0 : i32
    return %c0_i32, %arg0 : i32, i32
  }
}

</mosaic_0001>

<llo_original>
// kernel: tpu_custom_call.1
$region0: #{tpu_custom_call.1}
  #allocation0 [shape = 'u32[]', space=smem, size = 0x4, offset = 0x4, fixed_abs, tag = 'smem constant byte address 0x4 - core index']
  #allocation1 [shape = 'u32[144,128]{1,0:T(1,128)}', space=vmem, size = 0x12000, scoped, tag = 'internal scratch']
  %s0 = inlined_call_operand.hbm [shape: f32[4,4], index: 0, kind: input, shape index: {}]
  %s1 = inlined_call_operand.vmem [shape: f32[4], index: 1, kind: input, shape index: {}]
  %s2 = inlined_call_operand.vmem [shape: f32[4,16], index: 2, kind: input, shape index: {}]
  %s3 = inlined_call_operand.hbm [shape: f32[4,16], index: 3, kind: output, shape index: {}]
  %s4 = sld [smem:[#allocation0]]
  $region30: #{tpu_custom_call.1} parent=0
    _
  %s6 = ssub.s32 1, %s4
  %s7 = scalar_select 0, %s6, %s4
  $region1: #{tpu_custom_call.1} parent=0
    #allocation2 [shape = 'u8[2048]{0}', space=smem, size = 0x800, scoped, tag = 'input window, operand 0, single buffered']
    #allocation3 [shape = 's32[1]{0}', space=sflag, size = 0x4, scoped, tag = 'scoped memory for tpu_custom_call.1']
    #allocation4 [shape = 's32[1]{0}', space=sflag, size = 0x4, scoped, tag = 'scoped memory for tpu_custom_call.1']
    #allocation5 [shape = 's32[1]{0}', space=sflag, size = 0x4, scoped, tag = 'scoped memory for tpu_custom_call.1']
    #allocation6 [shape = 'u8[512]{0}', space=smem, size = 0x200, scoped, tag = 'input window, operand 1, single buffered']
    #allocation7 [shape = 'u8[2048]{0}', space=vmem, size = 0x800, scoped, tag = 'output window, operand 0, single buffered']
    %8 = vsyncpa [#allocation4], 0
    %9 = vsyncpa [#allocation5], 0
    %10 = vsyncpa [#allocation3], 0
    // Predicated region
    $region2: #{tpu_custom_call.1} parent=1 // pred_check
      _
    $region3: #{tpu_custom_call.1} parent=1 // pred_check_branch
      %12 = sbr.rel (0) target = $region5
    $region4: #{tpu_custom_call.1} parent=1 // pred_region
      %s14 = ssub.s32 64, 64
      %15 = vsyncadd [#allocation4], %s14
      %18 = dma.hbm_to_smem %s0, 64, [#allocation2], [#allocation4]
    $region5: #{tpu_custom_call.1} parent=1 // pred_fallthru
      _
    // Predicated region
    $region6: #{tpu_custom_call.1} parent=1 // pred_check
      _
    $region7: #{tpu_custom_call.1} parent=1 // pred_check_branch
      %20 = sbr.rel (0) target = $region9
    $region8: #{tpu_custom_call.1} parent=1 // pred_region
      %s22 = ssub.s32 16, 16
      %23 = vsyncadd [#allocation5], %s22
      %s25 = sshll.u32 %s1, 4
      %s26 = int_to_ptr.vmem [resolvable:$true] %s25
      %28 = dma.vmem_to_smem %s26, 16, [#allocation6], [#allocation5]
    $region9: #{tpu_custom_call.1} parent=1 // pred_fallthru
      _
    // Predicated region
    $region10: #{tpu_custom_call.1} parent=1 // pred_check
      _
    $region11: #{tpu_custom_call.1} parent=1 // pred_check_branch
      %30 = sbr.rel (0) target = $region13
    $region12: #{tpu_custom_call.1} parent=1 // pred_region
      _
    $region13: #{tpu_custom_call.1} parent=1 // pred_fallthru
      _
    // Predicated region
    $region14: #{tpu_custom_call.1} parent=1 // pred_check
      _
    $region15: #{tpu_custom_call.1} parent=1 // pred_check_branch
      %32 = sbr.rel (0) target = $region17
    $region16: #{tpu_custom_call.1} parent=1 // pred_region
      %33 = dma.done [#allocation4], 64
    $region17: #{tpu_custom_call.1} parent=1 // pred_fallthru
      _
    // Predicated region
    $region18: #{tpu_custom_call.1} parent=1 // pred_check
      _
    $region19: #{tpu_custom_call.1} parent=1 // pred_check_branch
      %35 = sbr.rel (0) target = $region21
    $region20: #{tpu_custom_call.1} parent=1 // pred_region
      %36 = dma.done [#allocation5], 16
    $region21: #{tpu_custom_call.1} parent=1 // pred_fallthru
      _
    %37 = sfence
    %v38 = vld [vmem:[%s2] sm:$0xf]
    %s39 = sld [smem:[#allocation2]]
    %v40 = vstv %s39
    %v41 = vmul.f32 %v38, %v40
    %s42 = sld [smem:[#allocation2 + $0x1]]
    %v43 = vstv %s42
    %v44 = vmul.f32 %v38, %v43
    %v46 = vrot.slane %v44, 1
    %v48 = vadd.f32 %v41, %v46
    %s49 = sld [smem:[#allocation2 + $0x2]]
    %v50 = vstv %s49
    %v51 = vmul.f32 %v38, %v50
    %v53 = vrot.slane %v51, 2
    %v55 = vadd.f32 %v48, %v53
    %s56 = sld [smem:[#allocation2 + $0x3]]
    %v57 = vstv %s56
    %v58 = vmul.f32 %v38, %v57
    %v60 = vrot.slane %v58, 3
    %v62 = vadd.f32 %v55, %v60
    %s63 = sld [smem:[#allocation6]]
    %v64 = vstv %s63
    %v65 = vadd.f32 %v62, %v64
    %s66 = sld [smem:[#allocation2 + $0x80]]
    %v67 = vstv %s66
    %v68 = vmul.f32 %v38, %v67
    %s69 = sld [smem:[#allocation2 + $0x81]]
    %v70 = vstv %s69
    %v71 = vmul.f32 %v38, %v70
    %v73 = vrot.slane %v71, 1
    %v75 = vadd.f32 %v68, %v73
    %s76 = sld [smem:[#allocation2 + $0x82]]
    %v77 = vstv %s76
    %v78 = vmul.f32 %v38, %v77
    %v80 = vrot.slane %v78, 2
    %v82 = vadd.f32 %v75, %v80
    %s83 = sld [smem:[#allocation2 + $0x83]]
    %v84 = vstv %s83
    %v85 = vmul.f32 %v38, %v84
    %v87 = vrot.slane %v85, 3
    %v89 = vadd.f32 %v82, %v87
    %s90 = sld [smem:[#allocation6 + $0x1]]
    %v91 = vstv %s90
    %v92 = vadd.f32 %v89, %v91
    %s93 = sld [smem:[#allocation2 + $0x100]]
    %v94 = vstv %s93
    %v95 = vmul.f32 %v38, %v94
    %s96 = sld [smem:[#allocation2 + $0x101]]
    %v97 = vstv %s96
    %v98 = vmul.f32 %v38, %v97
    %v100 = vrot.slane %v98, 1
    %v102 = vadd.f32 %v95, %v100
    %s103 = sld [smem:[#allocation2 + $0x102]]
    %v104 = vstv %s103
    %v105 = vmul.f32 %v38, %v104
    %v107 = vrot.slane %v105, 2
    %v109 = vadd.f32 %v102, %v107
    %s110 = sld [smem:[#allocation2 + $0x103]]
    %v111 = vstv %s110
    %v112 = vmul.f32 %v38, %v111
    %v114 = vrot.slane %v112, 3
    %v116 = vadd.f32 %v109, %v114
    %s117 = sld [smem:[#allocation6 + $0x2]]
    %v118 = vstv %s117
    %v119 = vadd.f32 %v116, %v118
    %s120 = sld [smem:[#allocation2 + $0x180]]
    %v121 = vstv %s120
    %v122 = vmul.f32 %v38, %v121
    %s123 = sld [smem:[#allocation2 + $0x181]]
    %v124 = vstv %s123
    %v125 = vmul.f32 %v38, %v124
    %v127 = vrot.slane %v125, 1
    %v129 = vadd.f32 %v122, %v127
    %s130 = sld [smem:[#allocation2 + $0x182]]
    %v131 = vstv %s130
    %v132 = vmul.f32 %v38, %v131
    %v134 = vrot.slane %v132, 2
    %v136 = vadd.f32 %v129, %v134
    %s137 = sld [smem:[#allocation2 + $0x183]]
    %v138 = vstv %s137
    %v139 = vmul.f32 %v38, %v138
    %v141 = vrot.slane %v139, 3
    %v143 = vadd.f32 %v136, %v141
    %s144 = sld [smem:[#allocation6 + $0x3]]
    %v145 = vstv %s144
    %v146 = vadd.f32 %v143, %v145
    %v148 = vrot.slane %v92, 7
    %v151 = vrot.slane %v119, 6
    %v154 = vrot.slane %v146, 5
    %vm156 = vcmask 1040384
    %v157 = vsel %vm156, %v65, %v148
    %vm158 = vcmask 1041408
    %v159 = vsel %vm158, %v157, %v151
    %vm160 = vcmask 1042432
    %v161 = vsel %vm160, %v159, %v154
    %vm162 = vcmask 125952
    %163 = vst.msk [vmem:[#allocation7] sm:$0xf] %vm162, %v161
    // Predicated region
    $region22: #{tpu_custom_call.1} parent=1 // pred_check
      _
    $region23: #{tpu_custom_call.1} parent=1 // pred_check_branch
      %165 = sbr.rel (0) target = $region25
    $region24: #{tpu_custom_call.1} parent=1 // pred_region
      %s167 = ssub.s32 64, 64
      %168 = vsyncadd [#allocation3], %s167
      %s170 = sshll.u32 [#allocation7], 4
      %s171 = int_to_ptr.vmem [resolvable:$true] %s170
      %173 = dma.vmem_to_hbm [thread:$0]  %s171, 64, %s3, [#allocation3]
    $region25: #{tpu_custom_call.1} parent=1 // pred_fallthru
      _
    // Predicated region
    $region26: #{tpu_custom_call.1} parent=1 // pred_check
      _
    $region27: #{tpu_custom_call.1} parent=1 // pred_check_branch
      %175 = sbr.rel (0) target = $region29
    $region28: #{tpu_custom_call.1} parent=1 // pred_region
      %176 = dma.done [#allocation3], 64
    $region29: #{tpu_custom_call.1} parent=1 // pred_fallthru
      _
    %177 = vsyncpa [#allocation3], 1
    %178 = vsyncpa [#allocation4], 1
    %179 = vsyncpa [#allocation5], 1

</llo_original>
